<compile_context>
chip_gen: v7x
topology: tpu7x:2x2x1
jax: 0.10.0
libtpu: 0.0.40
codegen_flags: <defaults>
</compile_context>

<pallas_src>
import numpy as np
import jax
import jax.numpy as jnp
from jax.experimental import pallas as pl
from jax.experimental.pallas import tpu as pltpu

NEG_SLOPE = 0.01  # PyTorch nn.LeakyReLU default negative_slope


def _leaky(x):
    return jnp.where(x >= 0, x, NEG_SLOPE * x)


# ----------------------------------------------------------------------------
# Glow-style squeeze (space-to-depth, factor 2) in NCHW — input-side glue.
# ----------------------------------------------------------------------------
def squeeze_nchw(x):
    B, C, H, W = x.shape
    x = x.reshape(B, C, H // 2, 2, W // 2, 2)
    x = jnp.transpose(x, (0, 1, 3, 5, 2, 4))
    return x.reshape(B, 4 * C, H // 2, W // 2)


# ----------------------------------------------------------------------------
# Parameter init (deterministic, PyTorch layouts: conv [Cout,Cin,3,3], linear [Dout,Din])
# ----------------------------------------------------------------------------
def init_params(key, cond_shape, num_cond_chans=4, num_block=5,
                linear_layer_dim=32, squeeze_first=True):
    if squeeze_first:
        C = 4 * cond_shape[0]
        H = cond_shape[1] // 2
    else:
        C = cond_shape[0]
        H = cond_shape[1]
    ncc = num_cond_chans
    keys = iter(jax.random.split(key, 64))

    def conv_p(cin, cout):
        scale = 1.0 / jnp.sqrt(cin * 9.0)
        w = jax.random.uniform(next(keys), (cout, cin, 3, 3), jnp.float32, -scale, scale)
        b = jax.random.uniform(next(keys), (cout,), jnp.float32, -scale, scale)
        return w, b

    blocks = [{"conv1": conv_p(C, ncc), "conv2": conv_p(ncc, ncc)}]
    for _ in range(num_block - 2):
        blocks.append({"conv1": conv_p(ncc, ncc), "conv2": conv_p(ncc, ncc * 2)})
        ncc *= 2
    din = ncc * (H // 2 ** (num_block - 2)) ** 2
    scale = 1.0 / jnp.sqrt(float(din))
    lw = jax.random.uniform(next(keys), (linear_layer_dim, din), jnp.float32, -scale, scale)
    lb = jax.random.uniform(next(keys), (linear_layer_dim,), jnp.float32, -scale, scale)
    blocks.append({"linear": (lw, lb)})
    return blocks


# ----------------------------------------------------------------------------
# One-time probe: determine pltpu.roll's sign convention on this backend.
#   jnp.roll convention: out[i] = x[(i - shift) % N]  (probe value 127.0)
#   opposite:            out[i] = x[(i + shift) % N]  (probe value 1.0)
# ----------------------------------------------------------------------------
def _detect_roll_is_jnp():
    def probe(x_ref, o_ref):
        o_ref[...] = pltpu.roll(x_ref[...], shift=1, axis=1)

    x = jnp.tile(jnp.arange(128, dtype=jnp.float32)[None, :], (8, 1))
    out = pl.pallas_call(
        probe, out_shape=jax.ShapeDtypeStruct((8, 128), jnp.float32))(x)
    v = float(out[0, 0])
    if v == 127.0:
        return True
    if v == 1.0:
        return False
    raise RuntimeError(f"unexpected pltpu.roll probe value: {v}")


# ----------------------------------------------------------------------------
# Host-side precompute of tiny per-geometry constants.
#   * tap masks: [9, CL] — mask[k, m]=1 iff lane m is a valid position of the
#     chunk and the 3x3 tap k reads an in-bounds input pixel (pad=1 semantics).
#   * downselect D: [CL, CL] — 0/1 matrix selecting (2io, 2jo) source lanes into
#     the stride-2 output layout (one nonzero per used column).
# ----------------------------------------------------------------------------
def _make_tap_masks(chunk_b, H, W, CL):
    m = np.zeros((9, CL), np.float32)
    for k in range(9):
        kh, kw = divmod(k, 3)
        for b in range(chunk_b):
            for i in range(H):
                if not (0 <= i + kh - 1 < H):
                    continue
                for j in range(W):
                    if 0 <= j + kw - 1 < W:
                        m[k, b * H * W + i * W + j] = 1.0
    return m


def _make_downselect(chunk_b, H, W, CL):
    Ho, Wo = (H + 1) // 2, (W + 1) // 2
    d = np.zeros((CL, CL), np.float32)
    for b in range(chunk_b):
        for io in range(Ho):
            for jo in range(Wo):
                d[b * H * W + 2 * io * W + 2 * jo,
                  b * Ho * Wo + io * Wo + jo] = 1.0
    return d, Ho, Wo


# ----------------------------------------------------------------------------
# One-time parameter preparation: kernel-ready layouts + static per-layer plan.
# ----------------------------------------------------------------------------
def prepare_params(params, cond_shape, batch, squeeze_first=True,
                   max_chunk_lanes=512):
    if squeeze_first:
        C0 = 4 * cond_shape[0]
        H, W = cond_shape[1] // 2, cond_shape[2] // 2
    else:
        C0, H, W = cond_shape
    num_block = len(params)

    # Batch chunking: constants are built per chunk (batch-independent scaling);
    # the chunk axis becomes a "parallel" grid dim (v7x has 2 TensorCores).
    hw = H * W
    chunk_b = 1
    for cb in range(1, batch + 1):
        if batch % cb == 0 and cb * hw <= max_chunk_lanes:
            chunk_b = cb
    num_chunks = batch // chunk_b
    CL = max(128, ((chunk_b * hw + 127) // 128) * 128)   # lane width per chunk

    roll_is_jnp = _detect_roll_is_jnp()

    # convs in execution order: (w, b, stride, pre_act, is_block_out)
    conv_defs = [(*params[0]["conv1"], 1, False, False),
                 (*params[0]["conv2"], 1, True, True)]
    for i in range(1, num_block - 1):
        conv_defs.append((*params[i]["conv1"], 1, True, False))
        conv_defs.append((*params[i]["conv2"], 2, True, True))

    geom_cache = {}
    mask_blocks, dsel_mats = [], []
    conv_w, bias_pieces = [], []
    plan = []
    b_off = out_off = 0
    cur_h, cur_w = H, W

    def geom_info(h, w):
        if (h, w) not in geom_cache:
            mask_blocks.append(_make_tap_masks(chunk_b, h, w, CL))
            shifts = []
            for kh in range(3):
                for kw in range(3):
                    d = (kh - 1) * w + (kw - 1)     # needed read offset (+d lanes)
                    s = (-d) if roll_is_jnp else d
                    shifts.append(s % CL)
            geom_cache[(h, w)] = (len(mask_blocks) - 1, tuple(shifts))
        return geom_cache[(h, w)]

    for (w_pt, b_pt, stride, pre_act, is_out) in conv_defs:
        cout, cin = int(w_pt.shape[0]), int(w_pt.shape[1])
        gi, shifts = geom_info(cur_h, cur_w)
        # PyTorch [Cout,Cin,3,3] -> stacked [Cout, 9*Cin], column = (kh*3+kw)*Cin + ci
        conv_w.append(jnp.transpose(w_pt, (0, 2, 3, 1))
                      .reshape(cout, 9 * cin).astype(jnp.bfloat16))
        bias_pieces.append(b_pt.reshape(cout, 1).astype(jnp.float32))
        b_pad = ((cout + 7) // 8) * 8
        if b_pad > cout:
            bias_pieces.append(jnp.zeros((b_pad - cout, 1), jnp.float32))
        if stride == 2:
            dmat, ho, wo = _make_downselect(chunk_b, cur_h, cur_w, CL)
            dsel_idx = len(dsel_mats)
            dsel_mats.append(dmat)
        else:
            dsel_idx, ho, wo = -1, cur_h, cur_w
        entry = dict(cin=cin, cout=cout, geom=gi, shifts=shifts, stride=stride,
                     pre_act=pre_act, is_block_out=is_out, dsel=dsel_idx,
                     b_off=b_off, ho=ho, wo=wo)
        if is_out:
            rows = ((cout + 7) // 8) * 8
            entry["out_off"], entry["out_rows"] = out_off, rows
            out_off += rows
        plan.append(entry)
        b_off += b_pad
        cur_h, cur_w = ho, wo

    lw, lb = params[-1]["linear"]
    # TODO(synk): final spatial > 1x1 (channel/spatial-interleaved Flatten) not fused.
    assert cur_h * cur_w == 1, "final feature map must be 1x1 for the fused linear"
    dout, din = int(lw.shape[0]), int(lw.shape[1])
    assert din == plan[-1]["cout"]
    lin_rows = ((dout + 7) // 8) * 8
    lin = dict(dout=dout, din=din, b_off=b_off, out_off=out_off, out_rows=lin_rows)
    bias_pieces.append(lb.reshape(dout, 1).astype(jnp.float32))
    if lin_rows > dout:
        bias_pieces.append(jnp.zeros((lin_rows - dout, 1), jnp.float32))
    b_off += lin_rows
    out_off += lin_rows

    arrays = dict(
        conv_w=conv_w,
        lin_w=lw.astype(jnp.bfloat16),
        bias=jnp.concatenate(bias_pieces, axis=0),                 # [Nb, 1] f32
        masks=jnp.asarray(np.concatenate(mask_blocks, axis=0)),    # [9*G, CL] f32
    )
    n_dsel = len(dsel_mats)
    if n_dsel:
        arrays["dsel"] = jnp.asarray(np.stack(dsel_mats)).astype(jnp.bfloat16)

    # cost estimate recomputed for the restructured kernel (review item)
    flops = 0
    for cv in plan:
        flops += 2 * cv["cout"] * 9 * cv["cin"] * CL
        if cv["stride"] == 2:
            flops += 2 * cv["cout"] * CL * CL
    flops += 2 * dout * din * CL
    flops *= num_chunks
    bytes_accessed = int(
        4 * C0 * CL * num_chunks
        + 2 * sum(int(np.prod(w.shape)) for w in conv_w)
        + 2 * dout * din
        + 4 * int(arrays["bias"].shape[0])
        + 4 * 9 * len(mask_blocks) * CL
        + 2 * n_dsel * CL * CL
        + 4 * out_off * CL * num_chunks)

    cfg = dict(squeeze_first=squeeze_first, chunk_b=chunk_b,
               num_chunks=num_chunks, chunk_lanes=CL, n_dsel=n_dsel,
               rows_total=out_off, lin=lin, flops=int(flops),
               bytes=bytes_accessed)
    return arrays, plan, cfg


# ----------------------------------------------------------------------------
# Fully fused kernel: 8 convs (roll+mask taps, one stacked MXU matmul each,
# fused bias + LeakyReLU) + final Linear.  Activations stay in vregs/VMEM as
# lane-dense [C, CL] values; a single lane-dense [rows_total, CL] slab is stored.
# ----------------------------------------------------------------------------
def _build_kernel(plan, cfg):
    n_conv = len(plan)
    n_dsel = cfg["n_dsel"]
    CL = cfg["chunk_lanes"]
    lin = cfg["lin"]

    def kernel(*refs):
        x_ref = refs[0]
        w_refs = refs[1:1 + n_conv]
        lin_w_ref = refs[1 + n_conv]
        bias_ref = refs[2 + n_conv]
        mask_ref = refs[3 + n_conv]
        dsel_ref = refs[4 + n_conv] if n_dsel else None
        out_ref = refs[-1]

        biases = bias_ref[...]                       # [Nb, 1]   f32
        masks = mask_ref[...]                        # [9*G, CL] f32

        h = x_ref[...]                               # [C0, CL] f32, lane-dense
        for ci, cv in enumerate(plan):
            if cv["pre_act"]:
                h = _leaky(h)                        # fused LeakyReLU (VPU, f32)
            base = 9 * cv["geom"]
            pieces = []
            for k in range(9):                       # 3x3 taps: roll (XLU) + mask (VPU)
                s = cv["shifts"][k]
                hk = h if s == 0 else pltpu.roll(h, shift=s, axis=1)
                pieces.append(hk * masks[base + k: base + k + 1, :])
            xstack = jnp.concatenate(pieces, axis=0).astype(jnp.bfloat16)  # [9Cin, CL]
            y = jnp.dot(w_refs[ci][...], xstack,
                        preferred_element_type=jnp.float32)               # [Cout, CL]
            if cv["stride"] == 2:
                # stride-2 = full-res conv + tiny 0/1 downselect matmul
                y = jnp.dot(y.astype(jnp.bfloat16), dsel_ref[cv["dsel"]],
                            preferred_element_type=jnp.float32)
            h = y + biases[cv["b_off"]: cv["b_off"] + cv["cout"], :]       # bias (f32)
            if cv["is_block_out"]:
                val = h
                if cv["out_rows"] > cv["cout"]:
                    val = jnp.concatenate(
                        [val, jnp.zeros((cv["out_rows"] - cv["cout"], CL),
                                        jnp.float32)], axis=0)
                out_ref[cv["out_off"]: cv["out_off"] + cv["out_rows"], :] = val

        # final block: LeakyReLU -> Flatten (1x1 spatial) -> Linear
        z = _leaky(h).astype(jnp.bfloat16)                                  # [Cf, CL]
        y = jnp.dot(lin_w_ref[...], z, preferred_element_type=jnp.float32)
        y = y + biases[lin["b_off"]: lin["b_off"] + lin["dout"], :]
        if lin["out_rows"] > lin["dout"]:
            y = jnp.concatenate(
                [y, jnp.zeros((lin["out_rows"] - lin["dout"], CL), jnp.float32)],
                axis=0)
        out_ref[lin["out_off"]: lin["out_off"] + lin["out_rows"], :] = y

    return kernel


def make_forward(plan, cfg):
    kernel = _build_kernel(plan, cfg)
    n_dsel = cfg["n_dsel"]
    CL = cfg["chunk_lanes"]
    chunk_b = cfg["chunk_b"]
    num_chunks = cfg["num_chunks"]
    rows_total = cfg["rows_total"]
    lin = cfg["lin"]

    def forward(arrays, c_nchw):
        c = squeeze_nchw(c_nchw) if cfg["squeeze_first"] else c_nchw
        B, C0, H, W = c.shape
        assert B == num_chunks * chunk_b
        # NCHW -> per-chunk lane-dense [C0, num_chunks * CL]
        xr = c.reshape(num_chunks, chunk_b, C0, H * W)
        xr = jnp.transpose(xr, (2, 0, 1, 3)).reshape(C0, num_chunks, chunk_b * H * W)
        pad = CL - chunk_b * H * W
        if pad:
            xr = jnp.pad(xr, ((0, 0), (0, 0), (0, pad)))
        x_cm = xr.reshape(C0, num_chunks * CL)

        inputs = [x_cm] + list(arrays["conv_w"]) + [arrays["lin_w"],
                                                    arrays["bias"],
                                                    arrays["masks"]]
        if n_dsel:
            inputs.append(arrays["dsel"])

        def _const(shape):
            nd = len(shape)
            return pl.BlockSpec(shape, lambda i, _nd=nd: (0,) * _nd)

        in_specs = [pl.BlockSpec((C0, CL), lambda i: (0, i))]
        in_specs += [_const(tuple(a.shape)) for a in inputs[1:]]
        out_shape = jax.ShapeDtypeStruct((rows_total, num_chunks * CL), jnp.float32)
        out_spec = pl.BlockSpec((rows_total, CL), lambda i: (0, i))

        slab = pl.pallas_call(
            kernel,
            grid=(num_chunks,),
            in_specs=in_specs,
            out_specs=out_spec,
            out_shape=out_shape,
            compiler_params=pltpu.CompilerParams(
                dimension_semantics=("parallel",)),
            cost_estimate=pl.CostEstimate(
                flops=cfg["flops"], transcendentals=0,
                bytes_accessed=cfg["bytes"]),
        )(*inputs)

        # unpack the lane-dense slab into PyTorch-shaped outputs (glue only)
        results = []
        for cv in plan:
            if not cv["is_block_out"]:
                continue
            cout, ho, wo = cv["cout"], cv["ho"], cv["wo"]
            sec = slab[cv["out_off"]: cv["out_off"] + cout, :]
            sec = sec.reshape(cout, num_chunks, CL)[:, :, :chunk_b * ho * wo]
            sec = sec.reshape(cout, num_chunks, chunk_b, ho, wo)
            results.append(jnp.transpose(sec, (1, 2, 0, 3, 4))
                           .reshape(B, cout, ho, wo))
        dout = lin["dout"]
        ls = slab[lin["out_off"]: lin["out_off"] + dout, :]
        ls = ls.reshape(dout, num_chunks, CL)[:, :, :chunk_b]
        results.append(jnp.transpose(ls, (1, 2, 0)).reshape(B, dout))
        return results

    return forward


# ----------------------------------------------------------------------------
# Plain-JAX reference (XLA convs) for a numerical sanity check.
# ----------------------------------------------------------------------------
def reference_forward(params, c_nchw, squeeze_first=True):
    c = squeeze_nchw(c_nchw) if squeeze_first else c_nchw
    num_block = len(params)

    def conv(x, w, b, stride):
        y = jax.lax.conv_general_dilated(
            x, w, window_strides=(stride, stride), padding=((1, 1), (1, 1)),
            dimension_numbers=("NCHW", "OIHW", "NCHW"))
        return y + b.reshape(1, -1, 1, 1)

    outs = []
    w1, b1 = params[0]["conv1"]
    w2, b2 = params[0]["conv2"]
    h = conv(c, w1, b1, 1)
    h = conv(jax.nn.leaky_relu(h, NEG_SLOPE), w2, b2, 1)
    outs.append(h)
    for i in range(1, num_block - 1):
        w1, b1 = params[i]["conv1"]
        w2, b2 = params[i]["conv2"]
        h = conv(jax.nn.leaky_relu(outs[-1], NEG_SLOPE), w1, b1, 1)
        h = conv(jax.nn.leaky_relu(h, NEG_SLOPE), w2, b2, 2)
        outs.append(h)
    lw, lb = params[-1]["linear"]
    z = jax.nn.leaky_relu(outs[-1], NEG_SLOPE).reshape(outs[-1].shape[0], -1)
    outs.append(z @ lw.T + lb)
    return outs


if __name__ == "__main__":
    key = jax.random.PRNGKey(0)
    kx, kp = jax.random.split(key)

    cond_shape = (4, 16, 16)          # (C, H, W) of the conditioning input
    batch = 2
    x = jax.random.normal(kx, (batch, *cond_shape), dtype=jnp.float32)

    params = init_params(kp, cond_shape, num_cond_chans=4, num_block=5,
                         linear_layer_dim=32, squeeze_first=True)
    arrays, plan, cfg = prepare_params(params, cond_shape, batch, squeeze_first=True)

    fwd = jax.jit(make_forward(plan, cfg))
    outs = jax.block_until_ready(fwd(arrays, x))

    expected = [(2, 4, 8, 8), (2, 8, 4, 4), (2, 16, 2, 2), (2, 32, 1, 1), (2, 32)]
    got = [tuple(int(d) for d in o.shape) for o in outs]
    assert got == expected, f"shape mismatch: {got} vs {expected}"
    assert all(bool(jnp.all(jnp.isfinite(o))) for o in outs)

    # numerical check vs plain-XLA reference.  Tolerance reflects the deliberate
    # bf16-matmul tradeoff (f32 accumulation, f32 bias/LeakyReLU).
    ref = reference_forward(params, x, squeeze_first=True)
    for a, b in zip(outs, ref):
        err = float(jnp.max(jnp.abs(a - b)))
        assert bool(jnp.allclose(a, b, atol=2e-2, rtol=2e-2)), f"max abs err {err}"

    print("KERNEL_OK")
</pallas_src>

<mosaic_0001>
module attributes {stable_mosaic.version = 11 : i64} {
  func.func @probe(%arg0: memref<8x128xf32, #tpu.memory_space<vmem>>, %arg1: memref<8x128xf32, #tpu.memory_space<vmem>>) attributes {dimension_semantics = [], scalar_prefetch = 0 : i64, scratch_operands = 0 : i64, tpu.core_type = #tpu.core_type<tc>} {
    %c0 = arith.constant 0 : index
    %c0_0 = arith.constant 0 : index
    %0 = vector.load %arg0[%c0, %c0_0] : memref<8x128xf32, #tpu.memory_space<vmem>>, vector<8x128xf32>
    %c1_i32 = arith.constant 1 : i32
    %1 = tpu.dynamic_rotate %0 by %c1_i32 dim 1 : vector<8x128xf32>, i32 -> vector<8x128xf32>
    %c0_1 = arith.constant 0 : index
    %c0_2 = arith.constant 0 : index
    %2 = vector.load %arg1[%c0_1, %c0_2] : memref<8x128xf32, #tpu.memory_space<vmem>>, vector<8x128xf32>
    tpu.vector_store %arg1[%c0_1, %c0_2], %1 {strides = array<i32>} : memref<8x128xf32, #tpu.memory_space<vmem>>, vector<8x128xf32>,
    return
  }
}

</mosaic_0001>

<llo_original>
// kernel: tpu_custom_call.1
$region0: #{tpu_custom_call.1}
  #allocation0 [shape = 'u32[]', space=smem, size = 0x4, offset = 0x4, fixed_abs, tag = 'smem constant byte address 0x4 - core index']
  #allocation1 [shape = 'u32[144,128]{1,0:T(1,128)}', space=vmem, size = 0x12000, scoped, tag = 'internal scratch']
  %s0 = inlined_call_operand.hbm [shape: f32[8,128], index: 0, kind: input, shape index: {}]
  %s1 = inlined_call_operand.hbm [shape: f32[8,128], index: 1, kind: output, shape index: {}]
  %s2 = sld [smem:[#allocation0]]
  $region18: #{tpu_custom_call.1} parent=0
    _
  %s4 = ssub.s32 1, %s2
  %s5 = scalar_select 0, %s4, %s2
  $region1: #{tpu_custom_call.1} parent=0
    #allocation2 [shape = 'u8[4096]{0}', space=vmem, size = 0x1000, scoped, tag = 'input window, operand 0, single buffered']
    #allocation3 [shape = 's32[1]{0}', space=sflag, size = 0x4, scoped, tag = 'scoped memory for tpu_custom_call.1']
    #allocation4 [shape = 's32[1]{0}', space=sflag, size = 0x4, scoped, tag = 'scoped memory for tpu_custom_call.1']
    #allocation5 [shape = 'u8[4096]{0}', space=vmem, size = 0x1000, scoped, tag = 'output window, operand 0, single buffered']
    %6 = vsyncpa [#allocation3], 0
    %7 = vsyncpa [#allocation4], 0
    // Predicated region
    $region2: #{tpu_custom_call.1} parent=1 // pred_check
      _
    $region3: #{tpu_custom_call.1} parent=1 // pred_check_branch
      %9 = sbr.rel (0) target = $region5
    $region4: #{tpu_custom_call.1} parent=1 // pred_region
      %s11 = ssub.s32 128, 128
      %12 = vsyncadd [#allocation3], %s11
      %s14 = sshll.u32 [#allocation2], 4
      %s15 = int_to_ptr.vmem [resolvable:$true] %s14
      %17 = dma.hbm_to_vmem [thread:$0]  %s0, 128, %s15, [#allocation3]
    $region5: #{tpu_custom_call.1} parent=1 // pred_fallthru
      _
    // Predicated region
    $region6: #{tpu_custom_call.1} parent=1 // pred_check
      _
    $region7: #{tpu_custom_call.1} parent=1 // pred_check_branch
      %19 = sbr.rel (0) target = $region9
    $region8: #{tpu_custom_call.1} parent=1 // pred_region
      %20 = dma.done [#allocation3], 128
    $region9: #{tpu_custom_call.1} parent=1 // pred_fallthru
      _
    %v21 = vld [vmem:[#allocation2] sm:$0xff]
    %22 = vrot.lane.b32.xlu0 %v21, 1
    %v23 = vpop.permute.xlu0 %22
    %24 = vst [vmem:[#allocation5] sm:$0xff] %v23
    // Predicated region
    $region10: #{tpu_custom_call.1} parent=1 // pred_check
      _
    $region11: #{tpu_custom_call.1} parent=1 // pred_check_branch
      %26 = sbr.rel (0) target = $region13
    $region12: #{tpu_custom_call.1} parent=1 // pred_region
      %s28 = ssub.s32 128, 128
      %29 = vsyncadd [#allocation4], %s28
      %s31 = sshll.u32 [#allocation5], 4
      %s32 = int_to_ptr.vmem [resolvable:$true] %s31
      %34 = dma.vmem_to_hbm [thread:$0]  %s32, 128, %s1, [#allocation4]
    $region13: #{tpu_custom_call.1} parent=1 // pred_fallthru
      _
    // Predicated region
    $region14: #{tpu_custom_call.1} parent=1 // pred_check
      _
    $region15: #{tpu_custom_call.1} parent=1 // pred_check_branch
      %36 = sbr.rel (0) target = $region17
    $region16: #{tpu_custom_call.1} parent=1 // pred_region
      %37 = dma.done [#allocation4], 128
    $region17: #{tpu_custom_call.1} parent=1 // pred_fallthru
      _
    %38 = vsyncpa [#allocation3], 1
    %39 = vsyncpa [#allocation4], 1

</llo_original>
